<compile_context>
chip_gen: v7x
topology: tpu7x:2x2x1
jax: 0.10.0
libtpu: 0.0.40
codegen_flags: <defaults>
</compile_context>

<pallas_src>
import functools

import jax
import jax.numpy as jnp
from jax.experimental import pallas as pl
from jax.experimental.pallas import tpu as pltpu

IN_DIM, H1, H2, OUT_DIM = 10, 64, 32, 1


def _round_up(n, m):
    return (n + m - 1) // m * m


def mlp_kernel(x_ref, w1_ref, b1_ref, w2_ref, b2_ref, w3_ref, b3_ref, o_ref):
    x = x_ref[...]                                                  # (10, TB) bf16
    # Linear(10, 64) + ReLU  -- bf16 MXU matmul, f32 accumulation, f32 epilogue
    h1 = jnp.dot(w1_ref[...], x, preferred_element_type=jnp.float32) + b1_ref[...]
    h1 = jnp.maximum(h1, 0.0)                                       # (64, TB) f32
    # Dropout(0.4): identity in eval mode.
    # TODO(synk): training-mode dropout would need pltpu.prng_seed / prng_random_bits.
    # Linear(64, 32) + ReLU
    h2 = jnp.dot(w2_ref[...], h1.astype(jnp.bfloat16),
                 preferred_element_type=jnp.float32) + b2_ref[...]
    h2 = jnp.maximum(h2, 0.0)                                       # (32, TB) f32
    # Linear(32, 1) -> lane-dense (1, TB) output tile
    out = jnp.dot(w3_ref[...], h2.astype(jnp.bfloat16),
                  preferred_element_type=jnp.float32) + b3_ref[...]
    o_ref[...] = out.astype(o_ref.dtype)


@functools.partial(jax.jit, static_argnames=("batch_tile",))
def wind_speed_predictor(x, params, *, batch_tile=2048):
    """x: (B, 10) f32.  params: (w1,b1,w2,b2,w3,b3) with w_i (out,in), b_i (out,1), f32.

    Returns (B, 1) f32.  batch_tile ~1K-4K amortizes the ~0.35us/step grid overhead
    while keeping the double-buffered x/out tiles tiny; cap lower (<=8K) if raising
    it on v5e/v7x without bumping vmem_limit_bytes.
    """
    B = x.shape[0]
    w1, b1, w2, b2, w3, b3 = params

    # Lane-friendly tile: multiple of 128, no larger than the (padded) batch.
    batch_tile = max(128, _round_up(min(batch_tile, B), 128))
    Bp = _round_up(B, batch_tile)

    # One-time wrapper-side layout change (fused under jit): batch onto lanes, bf16.
    xt = jnp.pad(x.T.astype(jnp.bfloat16), ((0, 0), (0, Bp - B)))   # (10, Bp)
    w1b, w2b, w3b = (w.astype(jnp.bfloat16) for w in (w1, w2, w3))

    grid = (Bp // batch_tile,)
    weight_bytes = 2 * (w1.size + w2.size + w3.size) + 4 * (b1.size + b2.size + b3.size)
    cost = pl.CostEstimate(
        flops=2 * Bp * (IN_DIM * H1 + H1 * H2 + H2 * OUT_DIM),
        transcendentals=0,
        bytes_accessed=Bp * (2 * IN_DIM + 4 * OUT_DIM) + int(weight_bytes),
    )

    out_t = pl.pallas_call(
        mlp_kernel,
        out_shape=jax.ShapeDtypeStruct((OUT_DIM, Bp), jnp.float32),
        grid_spec=pltpu.PrefetchScalarGridSpec(
            num_scalar_prefetch=0,
            grid=grid,
            in_specs=[
                pl.BlockSpec((IN_DIM, batch_tile), lambda i: (0, i)),   # x tile (lane-dense)
                pl.BlockSpec((H1, IN_DIM), lambda i: (0, 0)),           # w1 (64,10)
                pl.BlockSpec((H1, 1), lambda i: (0, 0)),                # b1 (64,1)
                pl.BlockSpec((H2, H1), lambda i: (0, 0)),               # w2 (32,64)
                pl.BlockSpec((H2, 1), lambda i: (0, 0)),                # b2 (32,1)
                pl.BlockSpec((OUT_DIM, H2), lambda i: (0, 0)),          # w3 (1,32)
                pl.BlockSpec((OUT_DIM, 1), lambda i: (0, 0)),           # b3 (1,1)
            ],
            out_specs=pl.BlockSpec((OUT_DIM, batch_tile), lambda i: (0, i)),
        ),
        compiler_params=pltpu.CompilerParams(
            dimension_semantics=("parallel",),   # lets v7x split grid steps across 2 TCs
        ),
        cost_estimate=cost,
    )(xt, w1b, b1, w2b, b2, w3b, b3)

    return out_t[:, :B].T                                            # (B, 1) f32


def init_params(key):
    """Deterministic init mimicking PyTorch's default nn.Linear init:
    U(-1/sqrt(fan_in), 1/sqrt(fan_in)). Weights stored (out, in), biases (out, 1)."""
    def linear(key, fan_in, fan_out):
        kw, kb = jax.random.split(key)
        bound = 1.0 / jnp.sqrt(float(fan_in))
        w = jax.random.uniform(kw, (fan_out, fan_in), jnp.float32, -bound, bound)
        b = jax.random.uniform(kb, (fan_out, 1), jnp.float32, -bound, bound)
        return w, b

    k1, k2, k3 = jax.random.split(key, 3)
    w1, b1 = linear(k1, IN_DIM, H1)
    w2, b2 = linear(k2, H1, H2)
    w3, b3 = linear(k3, H2, OUT_DIM)
    return (w1, b1, w2, b2, w3, b3)


def reference_forward(x, params):
    """Pure-JAX reference mirroring the kernel's numerics (bf16 operands, f32 acc)."""
    w1, b1, w2, b2, w3, b3 = params
    xb = x.astype(jnp.bfloat16)
    h1 = jnp.maximum(
        jnp.dot(xb, w1.astype(jnp.bfloat16).T,
                preferred_element_type=jnp.float32) + b1.T, 0.0)
    h2 = jnp.maximum(
        jnp.dot(h1.astype(jnp.bfloat16), w2.astype(jnp.bfloat16).T,
                preferred_element_type=jnp.float32) + b2.T, 0.0)
    return jnp.dot(h2.astype(jnp.bfloat16), w3.astype(jnp.bfloat16).T,
                   preferred_element_type=jnp.float32) + b3.T


if __name__ == "__main__":
    key = jax.random.PRNGKey(0)
    kx, kp = jax.random.split(key)
    params = init_params(kp)

    # Case 1: batch divisible by the tile (2-step pipelined grid).
    B = 256
    x = jax.random.normal(kx, (B, IN_DIM), jnp.float32)
    out = jax.block_until_ready(wind_speed_predictor(x, params, batch_tile=128))
    ref = reference_forward(x, params)
    assert out.shape == (B, OUT_DIM)
    assert jnp.allclose(out, ref, atol=2e-2, rtol=2e-2), \
        float(jnp.max(jnp.abs(out - ref)))

    # Case 2: batch NOT a multiple of the tile (exercises pad + slice path).
    B2 = 200
    x2 = x[:B2]
    out2 = jax.block_until_ready(wind_speed_predictor(x2, params, batch_tile=128))
    ref2 = reference_forward(x2, params)
    assert out2.shape == (B2, OUT_DIM)
    assert jnp.allclose(out2, ref2, atol=2e-2, rtol=2e-2), \
        float(jnp.max(jnp.abs(out2 - ref2)))

    print("KERNEL_OK")
</pallas_src>

<mosaic_0001>
module attributes {stable_mosaic.version = 11 : i64} {
  func.func @mlp_kernel(%arg0: i32, %arg1: memref<10x128xbf16, #tpu.memory_space<vmem>>, %arg2: memref<64x10xbf16, #tpu.memory_space<vmem>>, %arg3: memref<64x1xf32, #tpu.memory_space<vmem>>, %arg4: memref<32x64xbf16, #tpu.memory_space<vmem>>, %arg5: memref<32x1xf32, #tpu.memory_space<vmem>>, %arg6: memref<1x32xbf16, #tpu.memory_space<vmem>>, %arg7: memref<1x1xf32, #tpu.memory_space<vmem>>, %arg8: memref<1x128xf32, #tpu.memory_space<vmem>>) attributes {dimension_semantics = [#tpu.dimension_semantics<parallel>], iteration_bounds = array<i64: 2>, scalar_prefetch = 0 : i64, scratch_operands = 0 : i64, tpu.core_type = #tpu.core_type<tc>, window_params = [{transform_indices = @transform_0, window_bounds = array<i64: 10, 128>}, {pipeline_mode = #tpu.pipeline_mode<synchronous>, transform_indices = @transform_1, window_bounds = array<i64: 64, 10>}, {pipeline_mode = #tpu.pipeline_mode<synchronous>, transform_indices = @transform_2, window_bounds = array<i64: 64, 1>}, {pipeline_mode = #tpu.pipeline_mode<synchronous>, transform_indices = @transform_3, window_bounds = array<i64: 32, 64>}, {pipeline_mode = #tpu.pipeline_mode<synchronous>, transform_indices = @transform_4, window_bounds = array<i64: 32, 1>}, {pipeline_mode = #tpu.pipeline_mode<synchronous>, transform_indices = @transform_5, window_bounds = array<i64: 1, 32>}, {pipeline_mode = #tpu.pipeline_mode<synchronous>, transform_indices = @transform_6, window_bounds = array<i64: 1, 1>}, {transform_indices = @transform_7, window_bounds = array<i64: 1, 128>}]} {
    %c0 = arith.constant 0 : index
    %c0_0 = arith.constant 0 : index
    %0 = vector.load %arg1[%c0, %c0_0] : memref<10x128xbf16, #tpu.memory_space<vmem>>, vector<10x128xbf16>
    %c0_1 = arith.constant 0 : index
    %c0_2 = arith.constant 0 : index
    %1 = vector.load %arg2[%c0_1, %c0_2] : memref<64x10xbf16, #tpu.memory_space<vmem>>, vector<64x10xbf16>
    %cst = arith.constant dense<0.000000e+00> : vector<64x128xf32>
    %2 = tpu.matmul %1, %0, %cst {dimension_numbers = #tpu.dot_dimension_numbers<[1], [0], [0], [1], [0, 0, 1, 1], [], []>} : vector<64x10xbf16>, vector<10x128xbf16>, vector<64x128xf32> -> vector<64x128xf32>
    %c0_3 = arith.constant 0 : index
    %c0_4 = arith.constant 0 : index
    %3 = vector.load %arg3[%c0_3, %c0_4] : memref<64x1xf32, #tpu.memory_space<vmem>>, vector<64x1xf32>
    %4 = vector.broadcast %3 : vector<64x1xf32> to vector<64x128xf32>
    %5 = arith.addf %2, %4 : vector<64x128xf32>
    %cst_5 = arith.constant 0.000000e+00 : f32
    %6 = vector.broadcast %cst_5 : f32 to vector<64x128xf32>
    %7 = arith.maximumf %5, %6 : vector<64x128xf32>
    %c0_6 = arith.constant 0 : index
    %c0_7 = arith.constant 0 : index
    %8 = vector.load %arg4[%c0_6, %c0_7] : memref<32x64xbf16, #tpu.memory_space<vmem>>, vector<32x64xbf16>
    %9 = arith.truncf %7 : vector<64x128xf32> to vector<64x128xbf16>
    %cst_8 = arith.constant dense<0.000000e+00> : vector<32x128xf32>
    %10 = tpu.matmul %8, %9, %cst_8 {dimension_numbers = #tpu.dot_dimension_numbers<[1], [0], [0], [1], [0, 0, 1, 1], [], []>} : vector<32x64xbf16>, vector<64x128xbf16>, vector<32x128xf32> -> vector<32x128xf32>
    %c0_9 = arith.constant 0 : index
    %c0_10 = arith.constant 0 : index
    %11 = vector.load %arg5[%c0_9, %c0_10] : memref<32x1xf32, #tpu.memory_space<vmem>>, vector<32x1xf32>
    %12 = vector.broadcast %11 : vector<32x1xf32> to vector<32x128xf32>
    %13 = arith.addf %10, %12 : vector<32x128xf32>
    %cst_11 = arith.constant 0.000000e+00 : f32
    %14 = vector.broadcast %cst_11 : f32 to vector<32x128xf32>
    %15 = arith.maximumf %13, %14 : vector<32x128xf32>
    %c0_12 = arith.constant 0 : index
    %c0_13 = arith.constant 0 : index
    %16 = vector.load %arg6[%c0_12, %c0_13] : memref<1x32xbf16, #tpu.memory_space<vmem>>, vector<1x32xbf16>
    %17 = arith.truncf %15 : vector<32x128xf32> to vector<32x128xbf16>
    %cst_14 = arith.constant dense<0.000000e+00> : vector<1x128xf32>
    %18 = tpu.matmul %16, %17, %cst_14 {dimension_numbers = #tpu.dot_dimension_numbers<[1], [0], [0], [1], [0, 0, 1, 1], [], []>} : vector<1x32xbf16>, vector<32x128xbf16>, vector<1x128xf32> -> vector<1x128xf32>
    %c0_15 = arith.constant 0 : index
    %c0_16 = arith.constant 0 : index
    %19 = vector.load %arg7[%c0_15, %c0_16] : memref<1x1xf32, #tpu.memory_space<vmem>>, vector<1x1xf32>
    %20 = vector.broadcast %19 : vector<1x1xf32> to vector<1x128xf32>
    %21 = arith.addf %18, %20 : vector<1x128xf32>
    %c0_17 = arith.constant 0 : index
    %c0_18 = arith.constant 0 : index
    %22 = vector.load %arg8[%c0_17, %c0_18] : memref<1x128xf32, #tpu.memory_space<vmem>>, vector<1x128xf32>
    tpu.vector_store %arg8[%c0_17, %c0_18], %21 {strides = array<i32>} : memref<1x128xf32, #tpu.memory_space<vmem>>, vector<1x128xf32>,
    return
  }
  func.func @transform_0(%arg0: i32) -> (i32, i32) {
    %c0_i32 = arith.constant 0 : i32
    %c0_i32_0 = arith.constant 0 : i32
    return %c0_i32, %arg0 : i32, i32
  }
  func.func @transform_1(%arg0: i32) -> (i32, i32) {
    %c0_i32 = arith.constant 0 : i32
    %c0_i32_0 = arith.constant 0 : i32
    %c0_i32_1 = arith.constant 0 : i32
    return %c0_i32, %c0_i32_0 : i32, i32
  }
  func.func @transform_2(%arg0: i32) -> (i32, i32) {
    %c0_i32 = arith.constant 0 : i32
    %c0_i32_0 = arith.constant 0 : i32
    %c0_i32_1 = arith.constant 0 : i32
    return %c0_i32, %c0_i32_0 : i32, i32
  }
  func.func @transform_3(%arg0: i32) -> (i32, i32) {
    %c0_i32 = arith.constant 0 : i32
    %c0_i32_0 = arith.constant 0 : i32
    %c0_i32_1 = arith.constant 0 : i32
    return %c0_i32, %c0_i32_0 : i32, i32
  }
  func.func @transform_4(%arg0: i32) -> (i32, i32) {
    %c0_i32 = arith.constant 0 : i32
    %c0_i32_0 = arith.constant 0 : i32
    %c0_i32_1 = arith.constant 0 : i32
    return %c0_i32, %c0_i32_0 : i32, i32
  }
  func.func @transform_5(%arg0: i32) -> (i32, i32) {
    %c0_i32 = arith.constant 0 : i32
    %c0_i32_0 = arith.constant 0 : i32
    %c0_i32_1 = arith.constant 0 : i32
    return %c0_i32, %c0_i32_0 : i32, i32
  }
  func.func @transform_6(%arg0: i32) -> (i32, i32) {
    %c0_i32 = arith.constant 0 : i32
    %c0_i32_0 = arith.constant 0 : i32
    %c0_i32_1 = arith.constant 0 : i32
    return %c0_i32, %c0_i32_0 : i32, i32
  }
  func.func @transform_7(%arg0: i32) -> (i32, i32) {
    %c0_i32 = arith.constant 0 : i32
    %c0_i32_0 = arith.constant 0 : i32
    return %c0_i32, %arg0 : i32, i32
  }
}

</mosaic_0001>

<llo_original>
// kernel: wind_speed_predictor.1
$region0: #{wind_speed_predictor.1}
  #allocation0 [shape = 'u32[]', space=smem, size = 0x4, offset = 0x4, fixed_abs, tag = 'smem constant byte address 0x4 - core index']
  #allocation1 [shape = 'u32[144,128]{1,0:T(1,128)}', space=vmem, size = 0x12000, scoped, tag = 'internal scratch']
  #allocation2 [shape = 'f32[1,1]{1,0:T(1,128)S(1)}', space=vmem, size = 0x200, scoped, tag = 'scoped memory for wind_speed_predictor.1']
  %s0 = inlined_call_operand.vmem [shape: bf16[10,256], index: 0, kind: input, shape index: {}]
  %s1 = inlined_call_operand.vmem [shape: bf16[64,10], index: 1, kind: input, shape index: {}]
  %s2 = inlined_call_operand.vmem [shape: f32[64,1], index: 2, kind: input, shape index: {}]
  %s3 = inlined_call_operand.vmem [shape: bf16[32,64], index: 3, kind: input, shape index: {}]
  %s4 = inlined_call_operand.vmem [shape: f32[32,1], index: 4, kind: input, shape index: {}]
  %s5 = inlined_call_operand.vmem [shape: bf16[1,32], index: 5, kind: input, shape index: {}]
  %s6 = inlined_call_operand.<no memory space> [shape: f32[1,1], index: 6, kind: input, shape index: {}]
  %s7 = inlined_call_operand.hbm [shape: f32[1,256], index: 7, kind: output, shape index: {}]
  %s8 = sld [smem:[#allocation0]]
  $region102: #{wind_speed_predictor.1} parent=0
    _
  %s10 = ssub.s32 1, %s8
  %s11 = scalar_select 0, %s10, %s8
  %v12 = vstv %s6
  %13 = vst [vmem:[#allocation2] sm:$0x1] %v12
  $region1: #{wind_speed_predictor.1} parent=0
    #allocation3 [shape = 'u8[8192]{0}', space=vmem, size = 0x2000, scoped, tag = 'input window, operand 0']
    #allocation4 [shape = 'u8[1024]{0}', space=vmem, size = 0x400, scoped, tag = 'output window, operand 0']
    #allocation5 [shape = 's32[2]{0}', space=sflag, size = 0x8, scoped, tag = 'scoped memory for wind_speed_predictor.1']
    %14 = vsyncpa [#allocation5], 0
    %s15 = scalar_lea.sflag [#allocation5], 1
    %16 = vsyncpa %s15, 0
    loop: start=0, step=1, limit=4
    $region2: #{wind_speed_predictor.1} parent=1 // loop_pre_header
      _
    $region3: #{wind_speed_predictor.1} parent=1 // loop_header
      %s18 = sphi 0, %s22
      %p19 = scmp.ge.s32.totalorder %s18, 4
      %s28 = sphi 0, %s30
      %s31 = sphi 0, %s28
      %s32 = sphi 0, %s31
      %s48 = sphi 0, %s32
      %s52 = sphi 0, %s52
      %s54 = sphi 0, %s52
      %s55 = sphi 0, %s54
      %s69 = sphi 0, %s55
      %s73 = sphi 0, %s73
      %s75 = sphi 0, %s73
      %s76 = sphi 0, %s75
      %s90 = sphi 0, %s76
      %s94 = sphi 0, %s94
      %s96 = sphi 0, %s94
      %s97 = sphi 0, %s96
      %s111 = sphi 0, %s97
      %s115 = sphi 0, %s115
      %s117 = sphi 0, %s115
      %s118 = sphi 0, %s117
      %s132 = sphi 0, %s118
      %s136 = sphi 0, %s136
      %s138 = sphi 0, %s136
      %s139 = sphi 0, %s138
      %s153 = sphi 0, %s139
      %s157 = sphi 0, %s157
      %s159 = sphi 0, %s157
      %s160 = sphi 0, %s159
      %s174 = sphi 0, %s160
      %s180 = sphi 0, %s182
      %s183 = sphi 0, %s180
      %s184 = sphi 0, %s183
      %s200 = sphi 0, %s184
    $region4: #{wind_speed_predictor.1} parent=1 // loop_header_branch
      %21 = sbr.rel (%p19) target = $region8
    $region5: #{wind_speed_predictor.1} parent=1 // loop_body
      %s23 = ssub.s32 %s18, 1
      %s24 = ssub.s32 %s18, 2
      %s25 = sadd.s32 %s18, 1
      %s26 = ssub.s32 %s18, %s25
      %p27 = scmp.eq.s32.totalorder %s26, 0
      %s29 = sadd.s32 %s28, 1
      %s30 = scalar_select %p27, %s28, %s29
      %p33 = pneg %p27
      %p34 = scmp.eq.s32.totalorder %s18, 1
      %p35 = por %p33, %p34
      %p36 = scmp.ne.s32.totalorder %s28, %s31
      %p37 = scmp.eq.s32.totalorder %s18, 0
      %p38 = por %p36, %p37
      %p39 = scmp.ne.s32.totalorder %s28, %s31
      %p40 = scmp.eq.s32.totalorder %s23, 1
      %p41 = por %p39, %p40
      %p42 = scmp.ne.s32.totalorder %s31, %s32
      %p43 = scmp.eq.s32.totalorder %s23, 0
      %p44 = por %p42, %p43
      %p45 = scmp.ne.s32.totalorder %s31, %s32
      %p46 = scmp.eq.s32.totalorder %s24, 1
      %p47 = por %p45, %p46
      %p49 = scmp.ne.s32.totalorder %s32, %s48
      %p50 = scmp.eq.s32.totalorder %s24, 0
      %p51 = por %p49, %p50
      %s53 = sadd.s32 %s52, 1
      %p56 = scmp.eq.s32.totalorder %s18, 1
      %p57 = scmp.ne.s32.totalorder %s52, %s54
      %p58 = scmp.eq.s32.totalorder %s18, 0
      %p59 = por %p57, %p58
      %p60 = scmp.ne.s32.totalorder %s52, %s54
      %p61 = scmp.eq.s32.totalorder %s23, 1
      %p62 = por %p60, %p61
      %p63 = scmp.ne.s32.totalorder %s54, %s55
      %p64 = scmp.eq.s32.totalorder %s23, 0
      %p65 = por %p63, %p64
      %p66 = scmp.ne.s32.totalorder %s54, %s55
      %p67 = scmp.eq.s32.totalorder %s24, 1
      %p68 = por %p66, %p67
      %p70 = scmp.ne.s32.totalorder %s55, %s69
      %p71 = scmp.eq.s32.totalorder %s24, 0
      %p72 = por %p70, %p71
      %s74 = sadd.s32 %s73, 1
      %p77 = scmp.eq.s32.totalorder %s18, 1
      %p78 = scmp.ne.s32.totalorder %s73, %s75
      %p79 = scmp.eq.s32.totalorder %s18, 0
      %p80 = por %p78, %p79
      %p81 = scmp.ne.s32.totalorder %s73, %s75
      %p82 = scmp.eq.s32.totalorder %s23, 1
      %p83 = por %p81, %p82
      %p84 = scmp.ne.s32.totalorder %s75, %s76
      %p85 = scmp.eq.s32.totalorder %s23, 0
      %p86 = por %p84, %p85
      %p87 = scmp.ne.s32.totalorder %s75, %s76
      %p88 = scmp.eq.s32.totalorder %s24, 1
      %p89 = por %p87, %p88
      %p91 = scmp.ne.s32.totalorder %s76, %s90
      %p92 = scmp.eq.s32.totalorder %s24, 0
      %p93 = por %p91, %p92
      %s95 = sadd.s32 %s94, 1
      %p98 = scmp.eq.s32.totalorder %s18, 1
      %p99 = scmp.ne.s32.totalorder %s94, %s96
      %p100 = scmp.eq.s32.totalorder %s18, 0
      %p101 = por %p99, %p100
      %p102 = scmp.ne.s32.totalorder %s94, %s96
      %p103 = scmp.eq.s32.totalorder %s23, 1
      %p104 = por %p102, %p103
      %p105 = scmp.ne.s32.totalorder %s96, %s97
      %p106 = scmp.eq.s32.totalorder %s23, 0
      %p107 = por %p105, %p106
      %p108 = scmp.ne.s32.totalorder %s96, %s97
      %p109 = scmp.eq.s32.totalorder %s24, 1
      %p110 = por %p108, %p109
      %p112 = scmp.ne.s32.totalorder %s97, %s111
      %p113 = scmp.eq.s32.totalorder %s24, 0
      %p114 = por %p112, %p113
      %s116 = sadd.s32 %s115, 1
      %p119 = scmp.eq.s32.totalorder %s18, 1
      %p120 = scmp.ne.s32.totalorder %s115, %s117
      %p121 = scmp.eq.s32.totalorder %s18, 0
      %p122 = por %p120, %p121
      %p123 = scmp.ne.s32.totalorder %s115, %s117
      %p124 = scmp.eq.s32.totalorder %s23, 1
      %p125 = por %p123, %p124
      %p126 = scmp.ne.s32.totalorder %s117, %s118
      %p127 = scmp.eq.s32.totalorder %s23, 0
      %p128 = por %p126, %p127
      %p129 = scmp.ne.s32.totalorder %s117, %s118
      %p130 = scmp.eq.s32.totalorder %s24, 1
      %p131 = por %p129, %p130
      %p133 = scmp.ne.s32.totalorder %s118, %s132
      %p134 = scmp.eq.s32.totalorder %s24, 0
      %p135 = por %p133, %p134
      %s137 = sadd.s32 %s136, 1
      %p140 = scmp.eq.s32.totalorder %s18, 1
      %p141 = scmp.ne.s32.totalorder %s136, %s138
      %p142 = scmp.eq.s32.totalorder %s18, 0
      %p143 = por %p141, %p142
      %p144 = scmp.ne.s32.totalorder %s136, %s138
      %p145 = scmp.eq.s32.totalorder %s23, 1
      %p146 = por %p144, %p145
      %p147 = scmp.ne.s32.totalorder %s138, %s139
      %p148 = scmp.eq.s32.totalorder %s23, 0
      %p149 = por %p147, %p148
      %p150 = scmp.ne.s32.totalorder %s138, %s139
      %p151 = scmp.eq.s32.totalorder %s24, 1
      %p152 = por %p150, %p151
      %p154 = scmp.ne.s32.totalorder %s139, %s153
      %p155 = scmp.eq.s32.totalorder %s24, 0
      %p156 = por %p154, %p155
      %s158 = sadd.s32 %s157, 1
      %p161 = scmp.eq.s32.totalorder %s18, 1
      %p162 = scmp.ne.s32.totalorder %s157, %s159
      %p163 = scmp.eq.s32.totalorder %s18, 0
      %p164 = por %p162, %p163
      %p165 = scmp.ne.s32.totalorder %s157, %s159
      %p166 = scmp.eq.s32.totalorder %s23, 1
      %p167 = por %p165, %p166
      %p168 = scmp.ne.s32.totalorder %s159, %s160
      %p169 = scmp.eq.s32.totalorder %s23, 0
      %p170 = por %p168, %p169
      %p171 = scmp.ne.s32.totalorder %s159, %s160
      %p172 = scmp.eq.s32.totalorder %s24, 1
      %p173 = por %p171, %p172
      %p175 = scmp.ne.s32.totalorder %s160, %s174
      %p176 = scmp.eq.s32.totalorder %s24, 0
      %p177 = por %p175, %p176
      %s178 = ssub.s32 %s18, %s25
      %p179 = scmp.eq.s32.totalorder %s178, 0
      %s181 = sadd.s32 %s180, 1
      %s182 = scalar_select %p179, %s180, %s181
      %p185 = pneg %p179
      %p186 = scmp.eq.s32.totalorder %s18, 1
      %p187 = por %p185, %p186
      %p188 = scmp.ne.s32.totalorder %s180, %s183
      %p189 = scmp.eq.s32.totalorder %s18, 0
      %p190 = por %p188, %p189
      %p191 = scmp.ne.s32.totalorder %s180, %s183
      %p192 = scmp.eq.s32.totalorder %s23, 1
      %p193 = por %p191, %p192
      %p194 = scmp.ne.s32.totalorder %s183, %s184
      %p195 = scmp.eq.s32.totalorder %s23, 0
      %p196 = por %p194, %p195
      %p197 = scmp.ne.s32.totalorder %s183, %s184
      %p198 = scmp.eq.s32.totalorder %s24, 1
      %p199 = por %p197, %p198
      %p201 = scmp.ne.s32.totalorder %s184, %s200
      %p202 = scmp.eq.s32.totalorder %s24, 0
      %p203 = por %p201, %p202
      %p204 = scmp.le.s32.totalorder 1, %s18
      %p205 = scmp.lt.s32.totalorder %s18, 3
      %p206 = pnand %p204, %p205
      %p207 = pneg %p206
      // Predicated region
      $region9: #{wind_speed_predictor.1} parent=5 // pred_check
        _
      $region10: #{wind_speed_predictor.1} parent=5 // pred_check_branch
        %209 = sbr.rel (%p206) target = $region12
      $region11: #{wind_speed_predictor.1} parent=5 // pred_region
        %s210 = ssub.s32 %s18, 1
        // Predicated region
        $region13: #{wind_speed_predictor.1} parent=11 // pred_check
          %p211 = pneg %p65
        $region14: #{wind_speed_predictor.1} parent=11 // pred_check_branch
          %213 = sbr.rel (%p211) target = $region16
        $region15: #{wind_speed_predictor.1} parent=11 // pred_region
          _
        $region16: #{wind_speed_predictor.1} parent=11 // pred_fallthru
          _
        // Predicated region
        $region17: #{wind_speed_predictor.1} parent=11 // pred_check
          %p214 = pneg %p86
        $region18: #{wind_speed_predictor.1} parent=11 // pred_check_branch
          %216 = sbr.rel (%p214) target = $region20
        $region19: #{wind_speed_predictor.1} parent=11 // pred_region
          _
        $region20: #{wind_speed_predictor.1} parent=11 // pred_fallthru
          _
        // Predicated region
        $region21: #{wind_speed_predictor.1} parent=11 // pred_check
          %p217 = pneg %p107
        $region22: #{wind_speed_predictor.1} parent=11 // pred_check_branch
          %219 = sbr.rel (%p217) target = $region24
        $region23: #{wind_speed_predictor.1} parent=11 // pred_region
          _
        $region24: #{wind_speed_predictor.1} parent=11 // pred_fallthru
          _
        // Predicated region
        $region25: #{wind_speed_predictor.1} parent=11 // pred_check
          %p220 = pneg %p128
        $region26: #{wind_speed_predictor.1} parent=11 // pred_check_branch
          %222 = sbr.rel (%p220) target = $region28
        $region27: #{wind_speed_predictor.1} parent=11 // pred_region
          _
        $region28: #{wind_speed_predictor.1} parent=11 // pred_fallthru
          _
        // Predicated region
        $region29: #{wind_speed_predictor.1} parent=11 // pred_check
          %p223 = pneg %p149
        $region30: #{wind_speed_predictor.1} parent=11 // pred_check_branch
          %225 = sbr.rel (%p223) target = $region32
        $region31: #{wind_speed_predictor.1} parent=11 // pred_region
          _
        $region32: #{wind_speed_predictor.1} parent=11 // pred_fallthru
          _
        // Predicated region
        $region33: #{wind_speed_predictor.1} parent=11 // pred_check
          %p226 = pneg %p170
        $region34: #{wind_speed_predictor.1} parent=11 // pred_check_branch
          %228 = sbr.rel (%p226) target = $region36
        $region35: #{wind_speed_predictor.1} parent=11 // pred_region
          _
        $region36: #{wind_speed_predictor.1} parent=11 // pred_fallthru
          _
      $region12: #{wind_speed_predictor.1} parent=5 // pred_fallthru
        _
      %p229 = scmp.lt.s32.totalorder %s18, 2
      // Predicated region
      $region37: #{wind_speed_predictor.1} parent=5 // pred_check
        %p230 = pneg %p229
      $region38: #{wind_speed_predictor.1} parent=5 // pred_check_branch
        %232 = sbr.rel (%p230) target = $region40
      $region39: #{wind_speed_predictor.1} parent=5 // pred_region
        // Predicated region
        $region41: #{wind_speed_predictor.1} parent=39 // pred_check
          %p233 = pneg %p38
        $region42: #{wind_speed_predictor.1} parent=39 // pred_check_branch
          %235 = sbr.rel (%p233) target = $region44
        $region43: #{wind_speed_predictor.1} parent=39 // pred_region
          %s236 = sand.u32 %s28, 1
          %s237 = sand.u32 %s28, 1
          %s238 = smul.addr %s237, 8
          %s239 = scalar_lea.vmem [#allocation3], %s238
          %s240 = smul.addr %s18, 4
          %s241 = scalar_lea.vmem %s0, %s240
          // Predicated region
          $region45: #{wind_speed_predictor.1} parent=43 // pred_check
            _
          $region46: #{wind_speed_predictor.1} parent=43 // pred_check_branch
            %243 = sbr.rel (0) target = $region48
          $region47: #{wind_speed_predictor.1} parent=43 // pred_region
            // Predicated region
            $region49: #{wind_speed_predictor.1} parent=47 // pred_check
              _
            $region50: #{wind_speed_predictor.1} parent=47 // pred_check_branch
              %245 = sbr.rel target = $region52
            $region51: #{wind_speed_predictor.1} parent=47 // pred_region
              // Predicated region
              $region64: #{wind_speed_predictor.1} parent=51 // pred_check
                _
              $region65: #{wind_speed_predictor.1} parent=51 // pred_check_branch
                %262 = sbr.rel (0) target = $region67
              $region66: #{wind_speed_predictor.1} parent=51 // pred_region
                loop: start=0, step=1, limit=1
                $region68: #{wind_speed_predictor.1} parent=66 // loop_pre_header
                  _
                $region69: #{wind_speed_predictor.1} parent=66 // loop_header
                  %s264 = sphi 0, %s268
                  %p265 = scmp.ge.s32.totalorder %s264, 1
                  %s269 = sphi %s241, %s241
                  %s270 = sphi %s239, %s239
                $region70: #{wind_speed_predictor.1} parent=66 // loop_header_branch
                  %267 = sbr.rel (%p265) target = $region74
                $region71: #{wind_speed_predictor.1} parent=66 // loop_body
                  _
                $region72: #{wind_speed_predictor.1} parent=66 // loop_footer
                  %s268 = sadd.s32 1, %s264
                $region73: #{wind_speed_predictor.1} parent=66 // loop_footer_branch
                  %263 = sbr.rel target = $region69
                $region74: #{wind_speed_predictor.1} parent=66 // loop_exit
                  _
                loop: start=0, step=1, limit=1
                $region75: #{wind_speed_predictor.1} parent=66 // loop_pre_header
                  _
                $region76: #{wind_speed_predictor.1} parent=66 // loop_header
                  %s273 = sphi 0, %s277
                  %p274 = scmp.ge.s32.totalorder %s273, 1
                  %s278 = sphi %s241, %s241
                  %s279 = sphi %s239, %s239
                $region77: #{wind_speed_predictor.1} parent=66 // loop_header_branch
                  %276 = sbr.rel (%p274) target = $region81
                $region78: #{wind_speed_predictor.1} parent=66 // loop_body
                  %v280 = vld [vmem:[%s278] sm:$0xf]
                  %281 = vst [vmem:[%s279] sm:$0xf] %v280
                  %v282 = vld [vmem:[%s278 + $0x8] sm:$0xf]
                  %283 = vst [vmem:[%s279 + $0x4] sm:$0xf] %v282
                $region79: #{wind_speed_predictor.1} parent=66 // loop_footer
                  %s277 = sadd.s32 1, %s273
                $region80: #{wind_speed_predictor.1} parent=66 // loop_footer_branch
                  %272 = sbr.rel target = $region76
                $region81: #{wind_speed_predictor.1} parent=66 // loop_exit
                  _
              $region67: #{wind_speed_predictor.1} parent=51 // pred_fallthru
                _
            $region52: #{wind_speed_predictor.1} parent=47 // pred_fallthru
              _
            // Predicated region
            $region53: #{wind_speed_predictor.1} parent=47 // pred_check
              _
            $region54: #{wind_speed_predictor.1} parent=47 // pred_check_branch
              %247 = sbr.rel (0) target = $region56
            $region55: #{wind_speed_predictor.1} parent=47 // pred_region
              loop: start=0, step=1, limit=1
              $region57: #{wind_speed_predictor.1} parent=55 // loop_pre_header
                _
              $region58: #{wind_speed_predictor.1} parent=55 // loop_header
                %s250 = sphi 0, %s254
                %p251 = scmp.ge.s32.totalorder %s250, 1
                %s255 = sphi %s241, %s241
                %s256 = sphi %s239, %s239
              $region59: #{wind_speed_predictor.1} parent=55 // loop_header_branch
                %253 = sbr.rel (%p251) target = $region63
              $region60: #{wind_speed_predictor.1} parent=55 // loop_body
                %v257 = vld [vmem:[%s255] sm:$0xf]
                %258 = vst [vmem:[%s256] sm:$0xf] %v257
                %v259 = vld [vmem:[%s255 + $0x8] sm:$0xf]
                %260 = vst [vmem:[%s256 + $0x4] sm:$0xf] %v259
              $region61: #{wind_speed_predictor.1} parent=55 // loop_footer
                %s254 = sadd.s32 1, %s250
              $region62: #{wind_speed_predictor.1} parent=55 // loop_footer_branch
                %249 = sbr.rel target = $region58
              $region63: #{wind_speed_predictor.1} parent=55 // loop_exit
                _
            $region56: #{wind_speed_predictor.1} parent=47 // pred_fallthru
              _
          $region48: #{wind_speed_predictor.1} parent=43 // pred_fallthru
            _
          %284 = vnop
        $region44: #{wind_speed_predictor.1} parent=39 // pred_fallthru
          _
      $region40: #{wind_speed_predictor.1} parent=5 // pred_fallthru
        _
      %p285 = scmp.le.s32.totalorder 1, %s18
      %p286 = scmp.lt.s32.totalorder %s18, 3
      %p287 = pnand %p285, %p286
      %p288 = pneg %p287
      // Predicated region
      $region82: #{wind_speed_predictor.1} parent=5 // pred_check
        _
      $region83: #{wind_speed_predictor.1} parent=5 // pred_check_branch
        %290 = sbr.rel (%p287) target = $region85
      $region84: #{wind_speed_predictor.1} parent=5 // pred_region
        %s291 = ssub.s32 %s18, 1
        %s292 = sand.u32 %s31, 1
        %s293 = sand.u32 %s31, 1
        %s294 = smul.addr %s293, 8
        %s295 = scalar_lea.vmem [#allocation3], %s294
        // Predicated region
        $region86: #{wind_speed_predictor.1} parent=84 // pred_check
          %p296 = pneg %p44
        $region87: #{wind_speed_predictor.1} parent=84 // pred_check_branch
          %298 = sbr.rel (%p296) target = $region89
        $region88: #{wind_speed_predictor.1} parent=84 // pred_region
          _
        $region89: #{wind_speed_predictor.1} parent=84 // pred_fallthru
          _
        %s299 = sand.u32 %s31, 1
        %s300 = sand.u32 %s31, 1
        %s301 = smul.addr %s300, 8
        %s302 = scalar_lea.vmem [#allocation3], %s301
        %p303 = pneg %p44
        %p304 = pneg %p41
        %p305 = pneg %p65
        %p306 = pneg %p62
        %p307 = pneg %p86
        %p308 = pneg %p83
        %p309 = pneg %p107
        %p310 = pneg %p104
        %p311 = pneg %p128
        %p312 = pneg %p125
        %p313 = pneg %p149
        %p314 = pneg %p146
        %p315 = pneg %p170
        %p316 = pneg %p167
        %p317 = pneg %p196
        %p318 = pneg %p193
        %s319 = sand.u32 %s183, 1
        %s320 = scalar_lea.sflag [#allocation5], %s319
        %s321 = sand.u32 %s183, 1
        %s322 = scalar_lea.vmem [#allocation4], %s321
        %v324 = vld [vmem:[%s295] sm:$0xf]
        %v325 = vld [vmem:[%s295 + $0x4] sm:$0x1]
        %v326 = vld [vmem:[%s1] sm:$0xf]
        %v327 = vld [vmem:[%s1 + $0x4] sm:$0xf]
        %v328 = vld [vmem:[%s1 + $0x8] sm:$0xf]
        %v329 = vld [vmem:[%s1 + $0xc] sm:$0xf]
        %v330 = vld [vmem:[%s1 + $0x10] sm:$0xf]
        %v331 = vld [vmem:[%s1 + $0x14] sm:$0xf]
        %v332 = vld [vmem:[%s1 + $0x18] sm:$0xf]
        %v333 = vld [vmem:[%s1 + $0x1c] sm:$0xf]
        %v334 = vld [vmem:[%s2] sm:$0xff]
        %v335 = vld [vmem:[%s2 + $0x8] sm:$0xff]
        %v336 = vld [vmem:[%s2 + $0x10] sm:$0xff]
        %v337 = vld [vmem:[%s2 + $0x18] sm:$0xff]
        %v338 = vld [vmem:[%s2 + $0x20] sm:$0xff]
        %v339 = vld [vmem:[%s2 + $0x28] sm:$0xff]
        %v340 = vld [vmem:[%s2 + $0x30] sm:$0xff]
        %v341 = vld [vmem:[%s2 + $0x38] sm:$0xff]
        %343 = vset.pattern.permute.xlu0 0
        %344 = vperm.xlu0 %343, %v334
        %v345 = vpop.permute.xlu0 %344
        %348 = vset.pattern.permute.xlu0 0
        %349 = vperm.xlu0 %348, %v335
        %v350 = vpop.permute.xlu0 %349
        %353 = vset.pattern.permute.xlu0 0
        %354 = vperm.xlu0 %353, %v336
        %v355 = vpop.permute.xlu0 %354
        %358 = vset.pattern.permute.xlu0 0
        %359 = vperm.xlu0 %358, %v337
        %v360 = vpop.permute.xlu0 %359
        %363 = vset.pattern.permute.xlu0 0
        %364 = vperm.xlu0 %363, %v338
        %v365 = vpop.permute.xlu0 %364
        %368 = vset.pattern.permute.xlu0 0
        %369 = vperm.xlu0 %368, %v339
        %v370 = vpop.permute.xlu0 %369
        %373 = vset.pattern.permute.xlu0 0
        %374 = vperm.xlu0 %373, %v340
        %v375 = vpop.permute.xlu0 %374
        %378 = vset.pattern.permute.xlu0 0
        %379 = vperm.xlu0 %378, %v341
        %v380 = vpop.permute.xlu0 %379
        %v390 = vunpack.c.l.b16 %v326
        %v391 = vunpack.c.l.b16 %v327
        %v392 = vunpack.c.l.b16 %v328
        %v393 = vunpack.c.l.b16 %v329
        %v394 = vunpack.c.l.b16 %v330
        %v395 = vunpack.c.l.b16 %v331
        %v396 = vunpack.c.l.b16 %v332
        %v397 = vunpack.c.l.b16 %v333
        %v398 = vpack.c.b16 %v391, %v390
        %v399 = vpack.c.b16 %v393, %v392
        %v400 = vpack.c.b16 %v395, %v394
        %v401 = vpack.c.b16 %v397, %v396
        %v404 = vunpack.c.l.b16 %v324
        %v405 = vunpack.c.l.b16 %v325
        %v406 = vpack.c.b16 %v405, %v404
        %vm407 = vcmask 80896
        %v409 = vsel %vm407, %v398, 0
        %v412 = vsel %vm407, %v399, 0
        %v415 = vsel %vm407, %v400, 0
        %v418 = vsel %vm407, %v401, 0
        %vm420 = vcmask 1044480
        %v422 = vsel %vm420, %v406, 0
        %424 = vmatprep.subr.bf16.mxu0 0
        %425 = vmatpush1.bf16.msra.mxu0 %v422
        %426 = vmatprep.subr.bf16.mxu0 0
        %427 = vmatpush1.bf16.msra.mxu0 0
        %428 = vmatprep.subr.bf16.mxu0 0
        %429 = vmatpush1.bf16.msra.mxu0 0
        %430 = vmatprep.subr.bf16.mxu0 0
        %431 = vmatpush1.bf16.msra.mxu0 0
        %432 = vmatprep.subr.bf16.mxu0 0
        %433 = vmatpush1.bf16.msra.mxu0 0
        %434 = vmatprep.subr.bf16.mxu0 0
        %435 = vmatpush1.bf16.msra.mxu0 0
        %436 = vmatprep.subr.bf16.mxu0 0
        %437 = vmatpush1.bf16.msra.mxu0 0
        %438 = vmatprep.subr.bf16.mxu0 0
        %439 = vmatpush1.bf16.msra.mxu0 0
        %440 = vmatprep.subr.bf16.mxu0 0
        %441 = vmatpush1.bf16.msra.mxu0 0
        %442 = vmatprep.subr.bf16.mxu0 0
        %443 = vmatpush1.bf16.msra.mxu0 0
        %444 = vmatprep.subr.bf16.mxu0 0
        %445 = vmatpush1.bf16.msra.mxu0 0
        %446 = vmatprep.subr.bf16.mxu0 0
        %447 = vmatpush1.bf16.msra.mxu0 0
        %448 = vmatprep.subr.bf16.mxu0 0
        %449 = vmatpush1.bf16.msra.mxu0 0
        %450 = vmatprep.subr.bf16.mxu0 0
        %451 = vmatpush1.bf16.msra.mxu0 0
        %452 = vmatprep.subr.bf16.mxu0 0
        %453 = vmatpush1.bf16.msra.mxu0 0
        %454 = vmatprep.subr.bf16.mxu0 0
        %455 = vmatpush1.bf16.msra.mxu0 0
        %456 = vmatprep.mubr.bf16.mxu0 0
        %457 = vmatmul.mubr.bf16.gmra.mrb[0].mxu0 %v409
        %v458 = vpop.f32.mrb[0].mxu0
        %v459 = vadd.f32 %v345, %v458
        %v460 = vpop.f32.mrb[0].mxu0
        %v461 = vpop.f32.mrb[0].mxu0
        %v462 = vadd.f32 %v350, %v461
        %v463 = vpop.f32.mrb[0].mxu0
        %464 = vmatprep.mubr.bf16.mxu0 0
        %465 = vmatmul.mubr.bf16.gmra.mrb[0].mxu0 %v412
        %v466 = vpop.f32.mrb[0].mxu0
        %v467 = vadd.f32 %v355, %v466
        %v468 = vpop.f32.mrb[0].mxu0
        %v469 = vpop.f32.mrb[0].mxu0
        %v470 = vadd.f32 %v360, %v469
        %v471 = vpop.f32.mrb[0].mxu0
        %472 = vmatprep.mubr.bf16.mxu0 0
        %473 = vmatmul.mubr.bf16.gmra.mrb[0].mxu0 %v415
        %v474 = vpop.f32.mrb[0].mxu0
        %v475 = vadd.f32 %v365, %v474
        %v476 = vpop.f32.mrb[0].mxu0
        %v477 = vpop.f32.mrb[0].mxu0
        %v478 = vadd.f32 %v370, %v477
        %v479 = vpop.f32.mrb[0].mxu0
        %480 = vmatprep.mubr.bf16.mxu0 0
        %481 = vmatmul.mubr.bf16.gmra.mrb[0].mxu0 %v418
        %v482 = vpop.f32.mrb[0].mxu0
        %v483 = vadd.f32 %v375, %v482
        %v484 = vpop.f32.mrb[0].mxu0
        %v485 = vpop.f32.mrb[0].mxu0
        %v486 = vadd.f32 %v380, %v485
        %v487 = vpop.f32.mrb[0].mxu0
        %488 = vdwg.mxu0
        %v489 = vmax.f32 %v459, 0.0
        %v490 = vmax.f32 %v462, 0.0
        %v491 = vmax.f32 %v467, 0.0
        %v492 = vmax.f32 %v470, 0.0
        %v493 = vmax.f32 %v475, 0.0
        %v494 = vmax.f32 %v478, 0.0
        %v495 = vmax.f32 %v483, 0.0
        %v496 = vmax.f32 %v486, 0.0
        %v497 = vld [vmem:[%s3] sm:$0xf]
        %v498 = vld [vmem:[%s3 + $0x4] sm:$0xf]
        %v499 = vld [vmem:[%s3 + $0x8] sm:$0xf]
        %v500 = vld [vmem:[%s3 + $0xc] sm:$0xf]
        %v501 = vpack.c.bf16 %v490, %v489
        %v502 = vpack.c.bf16 %v492, %v491
        %v503 = vpack.c.bf16 %v494, %v493
        %v504 = vpack.c.bf16 %v496, %v495
        %v505 = vld [vmem:[%s4] sm:$0xff]
        %v506 = vld [vmem:[%s4 + $0x8] sm:$0xff]
        %v507 = vld [vmem:[%s4 + $0x10] sm:$0xff]
        %v508 = vld [vmem:[%s4 + $0x18] sm:$0xff]
        %510 = vset.pattern.permute.xlu0 0
        %511 = vperm.xlu0 %510, %v505
        %v512 = vpop.permute.xlu0 %511
        %515 = vset.pattern.permute.xlu0 0
        %516 = vperm.xlu0 %515, %v506
        %v517 = vpop.permute.xlu0 %516
        %520 = vset.pattern.permute.xlu0 0
        %521 = vperm.xlu0 %520, %v507
        %v522 = vpop.permute.xlu0 %521
        %525 = vset.pattern.permute.xlu0 0
        %526 = vperm.xlu0 %525, %v508
        %v527 = vpop.permute.xlu0 %526
        %v533 = vunpack.c.l.b16 %v497
        %v534 = vunpack.c.l.b16 %v498
        %v535 = vunpack.c.l.b16 %v499
        %v536 = vunpack.c.l.b16 %v500
        %v537 = vpack.c.b16 %v534, %v533
        %v538 = vpack.c.b16 %v536, %v535
        %vm539 = vcmask 523264
        %v541 = vsel %vm539, %v537, 0
        %v544 = vsel %vm539, %v538, 0
        %546 = vmatprep.subr.bf16.mxu0 0
        %547 = vmatpush1.bf16.msra.mxu0 %v501
        %548 = vmatprep.subr.bf16.mxu0 0
        %549 = vmatpush1.bf16.msra.mxu0 %v502
        %550 = vmatprep.subr.bf16.mxu0 0
        %551 = vmatpush1.bf16.msra.mxu0 %v503
        %552 = vmatprep.subr.bf16.mxu0 0
        %553 = vmatpush1.bf16.msra.mxu0 %v504
        %554 = vmatprep.subr.bf16.mxu0 0
        %555 = vmatpush1.bf16.msra.mxu0 0
        %556 = vmatprep.subr.bf16.mxu0 0
        %557 = vmatpush1.bf16.msra.mxu0 0
        %558 = vmatprep.subr.bf16.mxu0 0
        %559 = vmatpush1.bf16.msra.mxu0 0
        %560 = vmatprep.subr.bf16.mxu0 0
        %561 = vmatpush1.bf16.msra.mxu0 0
        %562 = vmatprep.subr.bf16.mxu0 0
        %563 = vmatpush1.bf16.msra.mxu0 0
        %564 = vmatprep.subr.bf16.mxu0 0
        %565 = vmatpush1.bf16.msra.mxu0 0
        %566 = vmatprep.subr.bf16.mxu0 0
        %567 = vmatpush1.bf16.msra.mxu0 0
        %568 = vmatprep.subr.bf16.mxu0 0
        %569 = vmatpush1.bf16.msra.mxu0 0
        %570 = vmatprep.subr.bf16.mxu0 0
        %571 = vmatpush1.bf16.msra.mxu0 0
        %572 = vmatprep.subr.bf16.mxu0 0
        %573 = vmatpush1.bf16.msra.mxu0 0
        %574 = vmatprep.subr.bf16.mxu0 0
        %575 = vmatpush1.bf16.msra.mxu0 0
        %576 = vmatprep.subr.bf16.mxu0 0
        %577 = vmatpush1.bf16.msra.mxu0 0
        %578 = vmatprep.mubr.bf16.mxu0 0
        %579 = vmatmul.mubr.bf16.gmra.mrb[0].mxu0 %v541
        %v580 = vpop.f32.mrb[0].mxu0
        %v581 = vadd.f32 %v512, %v580
        %v582 = vpop.f32.mrb[0].mxu0
        %v583 = vpop.f32.mrb[0].mxu0
        %v584 = vadd.f32 %v517, %v583
        %v585 = vpop.f32.mrb[0].mxu0
        %586 = vmatprep.mubr.bf16.mxu0 0
        %587 = vmatmul.mubr.bf16.gmra.mrb[0].mxu0 %v544
        %v588 = vpop.f32.mrb[0].mxu0
        %v589 = vadd.f32 %v522, %v588
        %v590 = vpop.f32.mrb[0].mxu0
        %v591 = vpop.f32.mrb[0].mxu0
        %v592 = vadd.f32 %v527, %v591
        %v593 = vpop.f32.mrb[0].mxu0
        %594 = vdwg.mxu0
        %v595 = vmax.f32 %v581, 0.0
        %v596 = vmax.f32 %v584, 0.0
        %v597 = vmax.f32 %v589, 0.0
        %v598 = vmax.f32 %v592, 0.0
        %v599 = vld [vmem:[%s5] sm:$0x1]
        %v600 = vpack.c.bf16 %v596, %v595
        %v601 = vpack.c.bf16 %v598, %v597
        %v602 = vld [vmem:[#allocation2] sm:$0x1]
        %604 = vset.pattern.permute.xlu0 0
        %605 = vperm.xlu0 %604, %v602
        %v606 = vpop.permute.xlu0 %605
        %v608 = vlaneseq
        %v609 = vshrl.u32 %v608, 7
        %v610 = vsub.s32 0, %v609
        %v611 = vrot.slane %v606, %v610
        %vm612 = vcmask 261120
        %v614 = vsel %vm612, %v599, 0
        %616 = vmatprep.subr.bf16.mxu0 0
        %617 = vmatpush1.bf16.msra.mxu0 %v600
        %618 = vmatprep.subr.bf16.mxu0 0
        %619 = vmatpush1.bf16.msra.mxu0 %v601
        %620 = vmatprep.subr.bf16.mxu0 0
        %621 = vmatpush1.bf16.msra.mxu0 0
        %622 = vmatprep.subr.bf16.mxu0 0
        %623 = vmatpush1.bf16.msra.mxu0 0
        %624 = vmatprep.subr.bf16.mxu0 0
        %625 = vmatpush1.bf16.msra.mxu0 0
        %626 = vmatprep.subr.bf16.mxu0 0
        %627 = vmatpush1.bf16.msra.mxu0 0
        %628 = vmatprep.subr.bf16.mxu0 0
        %629 = vmatpush1.bf16.msra.mxu0 0
        %630 = vmatprep.subr.bf16.mxu0 0
        %631 = vmatpush1.bf16.msra.mxu0 0
        %632 = vmatprep.subr.bf16.mxu0 0
        %633 = vmatpush1.bf16.msra.mxu0 0
        %634 = vmatprep.subr.bf16.mxu0 0
        %635 = vmatpush1.bf16.msra.mxu0 0
        %636 = vmatprep.subr.bf16.mxu0 0
        %637 = vmatpush1.bf16.msra.mxu0 0
        %638 = vmatprep.subr.bf16.mxu0 0
        %639 = vmatpush1.bf16.msra.mxu0 0
        %640 = vmatprep.subr.bf16.mxu0 0
        %641 = vmatpush1.bf16.msra.mxu0 0
        %642 = vmatprep.subr.bf16.mxu0 0
        %643 = vmatpush1.bf16.msra.mxu0 0
        %644 = vmatprep.subr.bf16.mxu0 0
        %645 = vmatpush1.bf16.msra.mxu0 0
        %646 = vmatprep.subr.bf16.mxu0 0
        %647 = vmatpush1.bf16.msra.mxu0 0
        %648 = vmatprep.mubr.bf16.mxu0 0
        %649 = vmatmul.mubr.bf16.gmra.mrb[0].mxu0 %v614
        %v650 = vpop.f32.mrb[0].mxu0
        %v651 = vadd.f32 %v611, %v650
        %v652 = vpop.f32.mrb[0].mxu0
        %v653 = vpop.f32.mrb[0].mxu0
        %v654 = vpop.f32.mrb[0].mxu0
        %655 = vdwg.mxu0
        %656 = vst [vmem:[%s322] sm:$0x1] %v651
        %s657 = sand.u32 %s183, 1
        %s658 = scalar_lea.sflag [#allocation5], %s657
        %s659 = sand.u32 %s183, 1
        %s660 = scalar_lea.vmem [#allocation4], %s659
        // Predicated region
        $region90: #{wind_speed_predictor.1} parent=84 // pred_check
          %p661 = pneg %p193
        $region91: #{wind_speed_predictor.1} parent=84 // pred_check_branch
          %663 = sbr.rel (%p661) target = $region93
        $region92: #{wind_speed_predictor.1} parent=84 // pred_region
          %s665 = ssub.s32 16, 16
          %666 = vsyncadd %s658, %s665
          %s667 = smul.addr %s23, 16
          %s668 = scalar_lea.hbm %s7, %s667
          %s670 = sshll.u32 %s660, 4
          %s671 = int_to_ptr.vmem [resolvable:$true] %s670
          %673 = dma.vmem_to_hbm [thread:$0]  %s671, 16, %s668, %s658
        $region93: #{wind_speed_predictor.1} parent=84 // pred_fallthru
          _
      $region85: #{wind_speed_predictor.1} parent=5 // pred_fallthru
        _
      %p674 = scmp.le.s32.totalorder 2, %s18
      // Predicated region
      $region94: #{wind_speed_predictor.1} parent=5 // pred_check
        %p675 = pneg %p674
      $region95: #{wind_speed_predictor.1} parent=5 // pred_check_branch
        %677 = sbr.rel (%p675) target = $region97
      $region96: #{wind_speed_predictor.1} parent=5 // pred_region
        %s678 = ssub.s32 %s18, 2
        // Predicated region
        $region98: #{wind_speed_predictor.1} parent=96 // pred_check
          %p679 = pneg %p199
        $region99: #{wind_speed_predictor.1} parent=96 // pred_check_branch
          %681 = sbr.rel (%p679) target = $region101
        $region100: #{wind_speed_predictor.1} parent=96 // pred_region
          %s682 = sand.u32 %s184, 1
          %s683 = scalar_lea.sflag [#allocation5], %s682
          %s684 = sand.u32 %s184, 1
          %s685 = scalar_lea.vmem [#allocation4], %s684
          %686 = dma.done %s683, 16
        $region101: #{wind_speed_predictor.1} parent=96 // pred_fallthru
          _
      $region97: #{wind_speed_predictor.1} parent=5 // pred_fallthru
        _
    $region6: #{wind_speed_predictor.1} parent=1 // loop_footer
      %s22 = sadd.s32 1, %s18
    $region7: #{wind_speed_predictor.1} parent=1 // loop_footer_branch
      %17 = sbr.rel target = $region3
    $region8: #{wind_speed_predictor.1} parent=1 // loop_exit
      _
    %687 = vsyncpa [#allocation5], 1
    %s688 = scalar_lea.sflag [#allocation5], 1
    %689 = vsyncpa %s688, 1

</llo_original>
